<compile_context>
chip_gen: v7x
topology: tpu7x:2x2x1
jax: 0.10.0
libtpu: 0.0.40
codegen_flags: <defaults>
</compile_context>

<pallas_src>
import functools

import jax
import jax.numpy as jnp
from jax.experimental import pallas as pl
from jax.experimental.pallas import tpu as pltpu

NUM_CLASSES = 2


def _round_up(x, m):
    return (x + m - 1) // m * m


def learned_loss_kernel(x_ref, sign_ref, w12_ref, bvw_ref, bd_ref, out_ref,
                        *, batch, block_b):
    split = w12_ref.shape[0] // 2          # 64: rows [0:64]=W1, [64:128]=W2

    x = x_ref[...]                                              # (TB, 64) matmul dtype
    b1 = bvw_ref[0:1, :]                                        # (1, 64) f32
    b2 = bvw_ref[1:2, :]                                        # (1, 64) f32
    wd = bvw_ref[2:3, :]                                        # (1, 64) f32 = W3[:,1]-W3[:,0]

    # ---- layer 1: relu(x @ W1 + b1)   (single fused K=64 matmul) ----
    h = jnp.dot(x, w12_ref[0:split, :],
                preferred_element_type=jnp.float32) + b1
    h = jnp.maximum(h, 0.0)

    # ---- layer 2: relu(h @ W2 + b2) ----
    h = jnp.dot(h.astype(x.dtype), w12_ref[split:, :],
                preferred_element_type=jnp.float32) + b2
    h = jnp.maximum(h, 0.0)

    # ---- 2-class head: d = logits[:,1] - logits[:,0]  (VPU mul + lane reduce) ----
    d = jnp.sum(h * wd, axis=-1, keepdims=True) + bd_ref[0, 0]  # (TB, 1) f32

    # cross-entropy per row: lse - picked == softplus(sign * d), sign = +1/-1
    z = sign_ref[...] * d
    losses = jnp.maximum(z, 0.0) + jnp.log(1.0 + jnp.exp(-jnp.abs(z)))  # stable softplus

    # mask rows of the (possibly ragged) last tile out of the partial sum.
    # NOTE: must stay a select (jnp.where), not multiply-by-mask, so garbage
    # values in padded rows are dropped rather than propagated.
    row = (pl.program_id(0) * block_b
           + jax.lax.broadcasted_iota(jnp.int32, (block_b, 1), 0))
    partial = jnp.sum(jnp.where(row < batch, losses, 0.0))

    # lane-dense, unmasked full-vreg store of the per-tile partial sum
    out_ref[...] = jnp.full(out_ref.shape, partial, dtype=jnp.float32)


def prepare_params(params, matmul_dtype=jnp.bfloat16):
    """One-time weight prep (hoisted out of the per-training-step call).

    Returns:
      w12 : (128, 64) matmul_dtype  -- W1 stacked over W2 along sublanes
      bvw : (3, 64)   f32           -- rows: b1, b2, (W3[:,1]-W3[:,0])
      bd  : (1, 1)    f32           -- b3[1]-b3[0]   (SMEM scalar)
    """
    w1, b1, w2, b2, w3, b3 = params
    w12 = jnp.concatenate([w1, w2], axis=0).astype(matmul_dtype)            # (128, 64)
    bvw = jnp.stack([b1, b2, w3[:, 1] - w3[:, 0]], axis=0).astype(jnp.float32)  # (3, 64)
    bd = (b3[1] - b3[0]).reshape(1, 1).astype(jnp.float32)                  # (1, 1)
    return (w12, bvw, bd)


def learned_loss(output1, output2, label, prepared, *, block_b=2048):
    """output1, output2: (B, 32) float; label: (B,) int -> scalar mean CE loss."""
    w12, bvw, bd = prepared
    matmul_dtype = w12.dtype
    B, F = output1.shape
    D = 2 * F                                                    # 64

    # layer-1 fusion + halved input DMA: one (B, 64) array in the MXU dtype
    x = jnp.concatenate([output1, output2], axis=1).astype(matmul_dtype)
    # label -> f32 sign column: +1 for class 0, -1 for class 1
    sign = jnp.where(label.astype(jnp.int32) == 0, 1.0, -1.0
                     ).astype(jnp.float32).reshape(B, 1)

    # row tile: multiple of 8, default 2048 (amortizes ~600-cycle grid-step
    # overhead; ~3 MiB VMEM double-buffered -> fits v7x's tighter budget too)
    tb = min(block_b, _round_up(B, 8))
    num_tiles = pl.cdiv(B, tb)

    kernel = functools.partial(learned_loss_kernel, batch=B, block_b=tb)

    def resident(arr):   # tiny weight slab: whole array, constant index_map
        return pl.BlockSpec(arr.shape, lambda i: (0,) * arr.ndim)

    partials = pl.pallas_call(
        kernel,
        out_shape=jax.ShapeDtypeStruct((num_tiles, 8, 128), jnp.float32),
        grid=(num_tiles,),
        in_specs=[pl.BlockSpec((tb, D), lambda i: (i, 0)),       # x
                  pl.BlockSpec((tb, 1), lambda i: (i, 0)),       # sign
                  resident(w12), resident(bvw),
                  pl.BlockSpec(memory_space=pltpu.MemorySpace.SMEM)],  # bd scalar
        out_specs=pl.BlockSpec((1, 8, 128), lambda i: (i, 0, 0)),
        compiler_params=pltpu.CompilerParams(
            dimension_semantics=("parallel",)),
    )(x, sign, w12, bvw, bd)

    # final mean: one f32 per tile, reduced in XLA
    return jnp.sum(partials[:, 0, 0]) / B


def reference_loss(output1, output2, label, params):
    """Plain-JAX reference matching the PyTorch module."""
    w1, b1, w2, b2, w3, b3 = params
    x = jnp.concatenate([output1, output2], axis=1)
    h = jax.nn.relu(x @ w1 + b1)
    h = jax.nn.relu(h @ w2 + b2)
    logits = h @ w3 + b3
    logp = jax.nn.log_softmax(logits, axis=-1)
    return -jnp.mean(logp[jnp.arange(label.shape[0]), label])


def init_params(key):
    """Deterministic init; shapes follow nn.Linear(64,64), (64,64), (64,2)."""
    ks = jax.random.split(key, 6)

    def lin(kw, kb, fan_in, fan_out):
        bound = 1.0 / jnp.sqrt(fan_in)
        w = jax.random.uniform(kw, (fan_in, fan_out), jnp.float32, -bound, bound)
        b = jax.random.uniform(kb, (fan_out,), jnp.float32, -bound, bound)
        return w, b

    w1, b1 = lin(ks[0], ks[1], 64, 64)
    w2, b2 = lin(ks[2], ks[3], 64, 64)
    w3, b3 = lin(ks[4], ks[5], 64, 2)
    return (w1, b1, w2, b2, w3, b3)


if __name__ == "__main__":
    key = jax.random.PRNGKey(0)
    k1, k2, k3, kp = jax.random.split(key, 4)

    B = 8
    output1 = jax.random.normal(k1, (B, 32), jnp.float32)
    output2 = jax.random.normal(k2, (B, 32), jnp.float32)
    label = jax.random.randint(k3, (B,), 0, NUM_CLASSES, jnp.int32)
    params = init_params(kp)
    ref = reference_loss(output1, output2, label, params)

    # default bf16-MXU path (f32 accumulate / f32 elementwise) -- quantization tol
    prepared_bf16 = prepare_params(params)                       # bf16 default
    loss_bf16 = learned_loss(output1, output2, label, prepared_bf16)
    jax.block_until_ready(loss_bf16)
    assert jnp.allclose(loss_bf16, ref, atol=5e-2, rtol=5e-2), (loss_bf16, ref)

    # exact f32 path
    prepared_f32 = prepare_params(params, matmul_dtype=jnp.float32)
    loss_f32 = learned_loss(output1, output2, label, prepared_f32)
    jax.block_until_ready(loss_f32)
    assert jnp.allclose(loss_f32, ref, atol=1e-4, rtol=1e-4), (loss_f32, ref)

    # ragged-tile path (B not a multiple of the row tile) exercises row masking
    kk1, kk2, kk3 = jax.random.split(jax.random.PRNGKey(1), 3)
    B2 = 24
    o1b = jax.random.normal(kk1, (B2, 32), jnp.float32)
    o2b = jax.random.normal(kk2, (B2, 32), jnp.float32)
    labb = jax.random.randint(kk3, (B2,), 0, NUM_CLASSES, jnp.int32)
    loss2 = learned_loss(o1b, o2b, labb, prepared_f32, block_b=16)
    jax.block_until_ready(loss2)
    ref2 = reference_loss(o1b, o2b, labb, params)
    assert jnp.allclose(loss2, ref2, atol=1e-4, rtol=1e-4), (loss2, ref2)

    print("KERNEL_OK")
</pallas_src>

<mosaic_0001>
module attributes {stable_mosaic.version = 11 : i64} {
  func.func @learned_loss_kernel(%arg0: i32, %arg1: memref<8x64xbf16, #tpu.memory_space<vmem>>, %arg2: memref<8x1xf32, #tpu.memory_space<vmem>>, %arg3: memref<128x64xbf16, #tpu.memory_space<vmem>>, %arg4: memref<3x64xf32, #tpu.memory_space<vmem>>, %arg5: memref<1x1xf32, #tpu.memory_space<smem>>, %arg6: memref<1x8x128xf32, #tpu.memory_space<vmem>>) attributes {dimension_semantics = [#tpu.dimension_semantics<parallel>], iteration_bounds = array<i64: 1>, scalar_prefetch = 0 : i64, scratch_operands = 0 : i64, tpu.core_type = #tpu.core_type<tc>, window_params = [{transform_indices = @transform_0, window_bounds = array<i64: 8, 64>}, {transform_indices = @transform_1, window_bounds = array<i64: 8, 1>}, {pipeline_mode = #tpu.pipeline_mode<synchronous>, transform_indices = @transform_2, window_bounds = array<i64: 128, 64>}, {pipeline_mode = #tpu.pipeline_mode<synchronous>, transform_indices = @transform_3, window_bounds = array<i64: 3, 64>}, {transform_indices = @transform_4, window_bounds = array<i64: 1, 1>}, {transform_indices = @transform_5, window_bounds = array<i64: 1, 8, 128>}]} {
    %c0 = arith.constant 0 : index
    %c0_0 = arith.constant 0 : index
    %0 = vector.load %arg1[%c0, %c0_0] : memref<8x64xbf16, #tpu.memory_space<vmem>>, vector<8x64xbf16>
    %c0_1 = arith.constant 0 : index
    %c0_2 = arith.constant 0 : index
    %1 = vector.load %arg4[%c0_1, %c0_2] : memref<3x64xf32, #tpu.memory_space<vmem>>, vector<1x64xf32>
    %c1 = arith.constant 1 : index
    %c0_3 = arith.constant 0 : index
    %2 = vector.load %arg4[%c1, %c0_3] : memref<3x64xf32, #tpu.memory_space<vmem>>, vector<1x64xf32>
    %c2 = arith.constant 2 : index
    %c0_4 = arith.constant 0 : index
    %3 = vector.load %arg4[%c2, %c0_4] : memref<3x64xf32, #tpu.memory_space<vmem>>, vector<1x64xf32>
    %c0_5 = arith.constant 0 : index
    %c0_6 = arith.constant 0 : index
    %4 = vector.load %arg3[%c0_5, %c0_6] : memref<128x64xbf16, #tpu.memory_space<vmem>>, vector<64x64xbf16>
    %cst = arith.constant dense<0.000000e+00> : vector<8x64xf32>
    %5 = tpu.matmul %0, %4, %cst {dimension_numbers = #tpu.dot_dimension_numbers<[1], [0], [0], [1], [0, 0, 1, 1], [], []>} : vector<8x64xbf16>, vector<64x64xbf16>, vector<8x64xf32> -> vector<8x64xf32>
    %6 = vector.broadcast %1 : vector<1x64xf32> to vector<8x64xf32>
    %7 = arith.addf %5, %6 : vector<8x64xf32>
    %cst_7 = arith.constant 0.000000e+00 : f32
    %8 = vector.broadcast %cst_7 : f32 to vector<8x64xf32>
    %9 = arith.maximumf %7, %8 : vector<8x64xf32>
    %10 = arith.truncf %9 : vector<8x64xf32> to vector<8x64xbf16>
    %c64 = arith.constant 64 : index
    %c0_8 = arith.constant 0 : index
    %11 = vector.load %arg3[%c64, %c0_8] : memref<128x64xbf16, #tpu.memory_space<vmem>>, vector<64x64xbf16>
    %cst_9 = arith.constant dense<0.000000e+00> : vector<8x64xf32>
    %12 = tpu.matmul %10, %11, %cst_9 {dimension_numbers = #tpu.dot_dimension_numbers<[1], [0], [0], [1], [0, 0, 1, 1], [], []>} : vector<8x64xbf16>, vector<64x64xbf16>, vector<8x64xf32> -> vector<8x64xf32>
    %13 = vector.broadcast %2 : vector<1x64xf32> to vector<8x64xf32>
    %14 = arith.addf %12, %13 : vector<8x64xf32>
    %cst_10 = arith.constant 0.000000e+00 : f32
    %15 = vector.broadcast %cst_10 : f32 to vector<8x64xf32>
    %16 = arith.maximumf %14, %15 : vector<8x64xf32>
    %17 = vector.broadcast %3 : vector<1x64xf32> to vector<8x64xf32>
    %18 = arith.mulf %16, %17 : vector<8x64xf32>
    %cst_11 = arith.constant dense<0.000000e+00> : vector<8xf32>
    %19 = vector.multi_reduction <add>, %18, %cst_11 [1] : vector<8x64xf32> to vector<8xf32>
    %20 = vector.shape_cast %19 : vector<8xf32> to vector<8x1xf32>
    %c0_12 = arith.constant 0 : index
    %c0_13 = arith.constant 0 : index
    %21 = memref.load %arg5[%c0_12, %c0_13] : memref<1x1xf32, #tpu.memory_space<smem>>
    %22 = vector.broadcast %21 : f32 to vector<8x1xf32>
    %23 = arith.addf %20, %22 : vector<8x1xf32>
    %c0_14 = arith.constant 0 : index
    %c0_15 = arith.constant 0 : index
    %24 = vector.load %arg2[%c0_14, %c0_15] : memref<8x1xf32, #tpu.memory_space<vmem>>, vector<8x1xf32>
    %25 = arith.mulf %24, %23 : vector<8x1xf32>
    %cst_16 = arith.constant 0.000000e+00 : f32
    %26 = vector.broadcast %cst_16 : f32 to vector<8x1xf32>
    %27 = arith.maximumf %25, %26 : vector<8x1xf32>
    %28 = math.absf %25 : vector<8x1xf32>
    %cst_17 = arith.constant 0.000000e+00 : f32
    %29 = vector.broadcast %cst_17 : f32 to vector<8x1xf32>
    %30 = arith.subf %29, %28 : vector<8x1xf32>
    %31 = math.exp %30 : vector<8x1xf32>
    %cst_18 = arith.constant 1.000000e+00 : f32
    %32 = vector.broadcast %cst_18 : f32 to vector<8x1xf32>
    %33 = arith.addf %32, %31 : vector<8x1xf32>
    %34 = math.log %33 : vector<8x1xf32>
    %35 = arith.addf %27, %34 : vector<8x1xf32>
    %c8_i32 = arith.constant 8 : i32
    %36 = arith.muli %arg0, %c8_i32 : i32
    %37 = tpu.iota {dimensions = array<i32: 0>} : vector<8x1xi32>
    %38 = vector.broadcast %36 : i32 to vector<8x1xi32>
    %39 = arith.addi %38, %37 : vector<8x1xi32>
    %c8_i32_19 = arith.constant 8 : i32
    %40 = vector.broadcast %c8_i32_19 : i32 to vector<8x1xi32>
    %41 = arith.cmpi slt, %39, %40 : vector<8x1xi32>
    %cst_20 = arith.constant 0.000000e+00 : f32
    %42 = vector.broadcast %cst_20 : f32 to vector<8x1xf32>
    %43 = arith.select %41, %35, %42 : vector<8x1xi1>, vector<8x1xf32>
    %44 = vector.shape_cast %43 : vector<8x1xf32> to vector<1x8x1xf32>
    %cst_21 = arith.constant dense<0.000000e+00> : vector<1xf32>
    %45 = vector.multi_reduction <add>, %44, %cst_21 [1, 2] : vector<1x8x1xf32> to vector<1xf32>
    %46 = vector.shape_cast %45 : vector<1xf32> to vector<1x1x1xf32>
    %47 = vector.extract %46[0, 0, 0] : f32 from vector<1x1x1xf32>
    %48 = vector.broadcast %47 : f32 to vector<1x8x128xf32>
    %c0_22 = arith.constant 0 : index
    %c0_23 = arith.constant 0 : index
    %c0_24 = arith.constant 0 : index
    %49 = vector.load %arg6[%c0_22, %c0_23, %c0_24] : memref<1x8x128xf32, #tpu.memory_space<vmem>>, vector<1x8x128xf32>
    tpu.vector_store %arg6[%c0_22, %c0_23, %c0_24], %48 {strides = array<i32>} : memref<1x8x128xf32, #tpu.memory_space<vmem>>, vector<1x8x128xf32>,
    return
  }
  func.func @transform_0(%arg0: i32) -> (i32, i32) {
    %c0_i32 = arith.constant 0 : i32
    %c0_i32_0 = arith.constant 0 : i32
    return %arg0, %c0_i32 : i32, i32
  }
  func.func @transform_1(%arg0: i32) -> (i32, i32) {
    %c0_i32 = arith.constant 0 : i32
    %c0_i32_0 = arith.constant 0 : i32
    return %arg0, %c0_i32 : i32, i32
  }
  func.func @transform_2(%arg0: i32) -> (i32, i32) {
    %c0_i32 = arith.constant 0 : i32
    %c0_i32_0 = arith.constant 0 : i32
    %c0_i32_1 = arith.constant 0 : i32
    return %c0_i32, %c0_i32_0 : i32, i32
  }
  func.func @transform_3(%arg0: i32) -> (i32, i32) {
    %c0_i32 = arith.constant 0 : i32
    %c0_i32_0 = arith.constant 0 : i32
    %c0_i32_1 = arith.constant 0 : i32
    return %c0_i32, %c0_i32_0 : i32, i32
  }
  func.func @transform_4(%arg0: i32) -> (i32, i32) {
    %c0_i32 = arith.constant 0 : i32
    %c0_i32_0 = arith.constant 0 : i32
    %c0_i32_1 = arith.constant 0 : i32
    return %c0_i32, %c0_i32_0 : i32, i32
  }
  func.func @transform_5(%arg0: i32) -> (i32, i32, i32) {
    %c0_i32 = arith.constant 0 : i32
    %c0_i32_0 = arith.constant 0 : i32
    %c0_i32_1 = arith.constant 0 : i32
    return %arg0, %c0_i32, %c0_i32_0 : i32, i32, i32
  }
}

</mosaic_0001>

<llo_original>
// kernel: tpu_custom_call.1
$region0: #{tpu_custom_call.1}
  #allocation0 [shape = 'u32[]', space=smem, size = 0x4, offset = 0x4, fixed_abs, tag = 'smem constant byte address 0x4 - core index']
  #allocation1 [shape = 'u32[144,128]{1,0:T(1,128)}', space=vmem, size = 0x12000, scoped, tag = 'internal scratch']
  #allocation2 [shape = 'f32[1,1]{1,0:T(1,128)S(6)}', space=smem, size = 0x200, scoped, tag = 'scoped memory for tpu_custom_call.1']
  %s0 = inlined_call_operand.vmem [shape: bf16[8,64], index: 0, kind: input, shape index: {}]
  %s1 = inlined_call_operand.vmem [shape: f32[8,1], index: 1, kind: input, shape index: {}]
  %s2 = inlined_call_operand.vmem [shape: bf16[128,64], index: 2, kind: input, shape index: {}]
  %s3 = inlined_call_operand.vmem [shape: f32[3,64], index: 3, kind: input, shape index: {}]
  %s4 = inlined_call_operand.<no memory space> [shape: f32[1,1], index: 4, kind: input, shape index: {}]
  %s5 = inlined_call_operand.hbm [shape: f32[1,8,128], index: 5, kind: output, shape index: {}]
  %s6 = sld [smem:[#allocation0]]
  $region30: #{tpu_custom_call.1} parent=0
    _
  %s8 = ssub.s32 1, %s6
  %s9 = scalar_select 0, %s8, %s6
  %10 = sst [smem:[#allocation2]] %s4
  $region1: #{tpu_custom_call.1} parent=0
    #allocation3 [shape = 'u8[4096]{0}', space=vmem, size = 0x1000, scoped, tag = 'output window, operand 0, single buffered']
    #allocation4 [shape = 's32[1]{0}', space=sflag, size = 0x4, scoped, tag = 'scoped memory for tpu_custom_call.1']
    %11 = vsyncpa [#allocation4], 0
    // Predicated region
    $region2: #{tpu_custom_call.1} parent=1 // pred_check
      _
    $region3: #{tpu_custom_call.1} parent=1 // pred_check_branch
      %13 = sbr.rel (0) target = $region5
    $region4: #{tpu_custom_call.1} parent=1 // pred_region
      _
    $region5: #{tpu_custom_call.1} parent=1 // pred_fallthru
      _
    // Predicated region
    $region6: #{tpu_custom_call.1} parent=1 // pred_check
      _
    $region7: #{tpu_custom_call.1} parent=1 // pred_check_branch
      %15 = sbr.rel (0) target = $region9
    $region8: #{tpu_custom_call.1} parent=1 // pred_region
      _
    $region9: #{tpu_custom_call.1} parent=1 // pred_fallthru
      _
    // Predicated region
    $region10: #{tpu_custom_call.1} parent=1 // pred_check
      _
    $region11: #{tpu_custom_call.1} parent=1 // pred_check_branch
      %17 = sbr.rel (0) target = $region13
    $region12: #{tpu_custom_call.1} parent=1 // pred_region
      _
    $region13: #{tpu_custom_call.1} parent=1 // pred_fallthru
      _
    // Predicated region
    $region14: #{tpu_custom_call.1} parent=1 // pred_check
      _
    $region15: #{tpu_custom_call.1} parent=1 // pred_check_branch
      %19 = sbr.rel (0) target = $region17
    $region16: #{tpu_custom_call.1} parent=1 // pred_region
      _
    $region17: #{tpu_custom_call.1} parent=1 // pred_fallthru
      _
    // Predicated region
    $region18: #{tpu_custom_call.1} parent=1 // pred_check
      _
    $region19: #{tpu_custom_call.1} parent=1 // pred_check_branch
      %21 = sbr.rel (0) target = $region21
    $region20: #{tpu_custom_call.1} parent=1 // pred_region
      _
    $region21: #{tpu_custom_call.1} parent=1 // pred_fallthru
      _
    %v23 = vld [vmem:[%s0] sm:$0xf]
    %v24 = vld [vmem:[%s3] sm:$0x1]
    %v25 = vld [vmem:[%s3 + $0x1] sm:$0x1]
    %v26 = vld [vmem:[%s3 + $0x2] sm:$0x1]
    %v27 = vld [vmem:[%s2] sm:$0xf]
    %v28 = vld [vmem:[%s2 + $0x4] sm:$0xf]
    %v29 = vld [vmem:[%s2 + $0x8] sm:$0xf]
    %v30 = vld [vmem:[%s2 + $0xc] sm:$0xf]
    %v31 = vld [vmem:[%s2 + $0x10] sm:$0xf]
    %v32 = vld [vmem:[%s2 + $0x14] sm:$0xf]
    %v33 = vld [vmem:[%s2 + $0x18] sm:$0xf]
    %v34 = vld [vmem:[%s2 + $0x1c] sm:$0xf]
    %v35 = vlaneseq
    %v36 = vshrl.u32 %v35, 7
    %v37 = vsub.s32 0, %v36
    %v38 = vrot.slane %v24, %v37
    %v47 = vunpack.c.l.b16 %v27
    %v48 = vunpack.c.l.b16 %v28
    %v49 = vunpack.c.l.b16 %v29
    %v50 = vunpack.c.l.b16 %v30
    %v51 = vunpack.c.l.b16 %v31
    %v52 = vunpack.c.l.b16 %v32
    %v53 = vunpack.c.l.b16 %v33
    %v54 = vunpack.c.l.b16 %v34
    %v55 = vpack.c.b16 %v48, %v47
    %v56 = vpack.c.b16 %v50, %v49
    %v57 = vpack.c.b16 %v52, %v51
    %v58 = vpack.c.b16 %v54, %v53
    %vm63 = vcmask 523264
    %v65 = vsel %vm63, %v23, 0
    %67 = vmatprep.subr.bf16.mxu0 0
    %68 = vmatpush1.bf16.msra.mxu0 %v55
    %69 = vmatprep.subr.bf16.mxu0 0
    %70 = vmatpush1.bf16.msra.mxu0 %v56
    %71 = vmatprep.subr.bf16.mxu0 0
    %72 = vmatpush1.bf16.msra.mxu0 %v57
    %73 = vmatprep.subr.bf16.mxu0 0
    %74 = vmatpush1.bf16.msra.mxu0 %v58
    %75 = vmatprep.subr.bf16.mxu0 0
    %76 = vmatpush1.bf16.msra.mxu0 0
    %77 = vmatprep.subr.bf16.mxu0 0
    %78 = vmatpush1.bf16.msra.mxu0 0
    %79 = vmatprep.subr.bf16.mxu0 0
    %80 = vmatpush1.bf16.msra.mxu0 0
    %81 = vmatprep.subr.bf16.mxu0 0
    %82 = vmatpush1.bf16.msra.mxu0 0
    %83 = vmatprep.subr.bf16.mxu0 0
    %84 = vmatpush1.bf16.msra.mxu0 0
    %85 = vmatprep.subr.bf16.mxu0 0
    %86 = vmatpush1.bf16.msra.mxu0 0
    %87 = vmatprep.subr.bf16.mxu0 0
    %88 = vmatpush1.bf16.msra.mxu0 0
    %89 = vmatprep.subr.bf16.mxu0 0
    %90 = vmatpush1.bf16.msra.mxu0 0
    %91 = vmatprep.subr.bf16.mxu0 0
    %92 = vmatpush1.bf16.msra.mxu0 0
    %93 = vmatprep.subr.bf16.mxu0 0
    %94 = vmatpush1.bf16.msra.mxu0 0
    %95 = vmatprep.subr.bf16.mxu0 0
    %96 = vmatpush1.bf16.msra.mxu0 0
    %97 = vmatprep.subr.bf16.mxu0 0
    %98 = vmatpush1.bf16.msra.mxu0 0
    %99 = vmatprep.mubr.bf16.mxu0 0
    %100 = vmatmul.mubr.bf16.gmra.mrb[0].mxu0 %v65
    %v101 = vpop.f32.mrb[0].mxu0
    %v102 = vadd.f32 %v38, %v101
    %v103 = vpop.f32.mrb[0].mxu0
    %v104 = vpop.f32.mrb[0].mxu0
    %v105 = vpop.f32.mrb[0].mxu0
    %106 = vdwg.mxu0
    %v107 = vmax.f32 %v102, 0.0
    %v108 = vpack.c.bf16 %v107, %v107
    %v109 = vld [vmem:[%s2 + $0x20] sm:$0xf]
    %v110 = vld [vmem:[%s2 + $0x24] sm:$0xf]
    %v111 = vld [vmem:[%s2 + $0x28] sm:$0xf]
    %v112 = vld [vmem:[%s2 + $0x2c] sm:$0xf]
    %v113 = vld [vmem:[%s2 + $0x30] sm:$0xf]
    %v114 = vld [vmem:[%s2 + $0x34] sm:$0xf]
    %v115 = vld [vmem:[%s2 + $0x38] sm:$0xf]
    %v116 = vld [vmem:[%s2 + $0x3c] sm:$0xf]
    %v117 = vlaneseq
    %v118 = vshrl.u32 %v117, 7
    %v119 = vsub.s32 0, %v118
    %v120 = vrot.slane %v25, %v119
    %v129 = vunpack.c.l.b16 %v109
    %v130 = vunpack.c.l.b16 %v110
    %v131 = vunpack.c.l.b16 %v111
    %v132 = vunpack.c.l.b16 %v112
    %v133 = vunpack.c.l.b16 %v113
    %v134 = vunpack.c.l.b16 %v114
    %v135 = vunpack.c.l.b16 %v115
    %v136 = vunpack.c.l.b16 %v116
    %v137 = vpack.c.b16 %v130, %v129
    %v138 = vpack.c.b16 %v132, %v131
    %v139 = vpack.c.b16 %v134, %v133
    %v140 = vpack.c.b16 %v136, %v135
    %v146 = vsel %vm63, %v108, 0
    %148 = vmatprep.subr.bf16.mxu0 0
    %149 = vmatpush1.bf16.msra.mxu0 %v137
    %150 = vmatprep.subr.bf16.mxu0 0
    %151 = vmatpush1.bf16.msra.mxu0 %v138
    %152 = vmatprep.subr.bf16.mxu0 0
    %153 = vmatpush1.bf16.msra.mxu0 %v139
    %154 = vmatprep.subr.bf16.mxu0 0
    %155 = vmatpush1.bf16.msra.mxu0 %v140
    %156 = vmatprep.subr.bf16.mxu0 0
    %157 = vmatpush1.bf16.msra.mxu0 0
    %158 = vmatprep.subr.bf16.mxu0 0
    %159 = vmatpush1.bf16.msra.mxu0 0
    %160 = vmatprep.subr.bf16.mxu0 0
    %161 = vmatpush1.bf16.msra.mxu0 0
    %162 = vmatprep.subr.bf16.mxu0 0
    %163 = vmatpush1.bf16.msra.mxu0 0
    %164 = vmatprep.subr.bf16.mxu0 0
    %165 = vmatpush1.bf16.msra.mxu0 0
    %166 = vmatprep.subr.bf16.mxu0 0
    %167 = vmatpush1.bf16.msra.mxu0 0
    %168 = vmatprep.subr.bf16.mxu0 0
    %169 = vmatpush1.bf16.msra.mxu0 0
    %170 = vmatprep.subr.bf16.mxu0 0
    %171 = vmatpush1.bf16.msra.mxu0 0
    %172 = vmatprep.subr.bf16.mxu0 0
    %173 = vmatpush1.bf16.msra.mxu0 0
    %174 = vmatprep.subr.bf16.mxu0 0
    %175 = vmatpush1.bf16.msra.mxu0 0
    %176 = vmatprep.subr.bf16.mxu0 0
    %177 = vmatpush1.bf16.msra.mxu0 0
    %178 = vmatprep.subr.bf16.mxu0 0
    %179 = vmatpush1.bf16.msra.mxu0 0
    %180 = vmatprep.mubr.bf16.mxu0 0
    %181 = vmatmul.mubr.bf16.gmra.mrb[0].mxu0 %v146
    %v182 = vpop.f32.mrb[0].mxu0
    %v183 = vadd.f32 %v120, %v182
    %v184 = vpop.f32.mrb[0].mxu0
    %v185 = vpop.f32.mrb[0].mxu0
    %v186 = vpop.f32.mrb[0].mxu0
    %187 = vdwg.mxu0
    %v188 = vmax.f32 %v183, 0.0
    %v189 = vlaneseq
    %v190 = vshrl.u32 %v189, 7
    %v191 = vsub.s32 0, %v190
    %v192 = vrot.slane %v26, %v191
    %v193 = vmul.f32 %v188, %v192
    %v194 = vsel %vm63, %v193, 0.0
    %195 = vadd.xlane.f32.xlu0 %v194
    %v196 = vpop.xlane.xlu0 %195
    %s197 = sld [smem:[#allocation2]]
    %v198 = vstv %s197
    %v199 = vadd.f32 %v196, %v198
    %v200 = vld [vmem:[%s1] sm:$0xff]
    %v201 = vmul.f32 %v200, %v199
    %v202 = vmax.f32 %v201, 0.0
    %v203 = vand.u32 2147483647, %v201
    %v204 = vsub.f32 0.0, %v203
    %v205 = vmul.f32 %v204, 1.442695
    %v206 = vpow.pop %v205
    %v207 = vadd.f32 %v206, 1.0
    %v208 = vlog2.pop %v207
    %v209 = vmul.f32 %v208, 0.6931472
    %v210 = vadd.f32 %v202, %v209
    %s211 = smul.u32 0, 8
    %v212 = vlaneseq
    %v213 = vshrl.u32 %v212, 7
    %v214 = vstv %s211
    %v215 = vadd.s32 %v214, %v213
    %vm216 = vcmp.lt.s32.totalorder %v215, 8
    %v217 = vsel %vm216, %v210, 0.0
    %vm218 = vcmask 7168
    %v219 = vsel %vm218, %v217, 0.0
    %220 = vadd.xlane.f32.xlu0 %v219
    %v221 = vpop.xlane.xlu0 %220
    %v222 = vrot.slane %v221, 4
    %v223 = vadd.f32 %v221, %v222
    %v224 = vrot.slane %v223, 2
    %v225 = vadd.f32 %v223, %v224
    %v226 = vrot.slane %v225, 1
    %v227 = vadd.f32 %v225, %v226
    %s228 = vtos %v227
    %v229 = vstv %s228
    %230 = vst [vmem:[#allocation3] sm:$0xff] %v229
    // Predicated region
    $region22: #{tpu_custom_call.1} parent=1 // pred_check
      _
    $region23: #{tpu_custom_call.1} parent=1 // pred_check_branch
      %232 = sbr.rel (0) target = $region25
    $region24: #{tpu_custom_call.1} parent=1 // pred_region
      %s234 = ssub.s32 128, 128
      %235 = vsyncadd [#allocation4], %s234
      %s237 = sshll.u32 [#allocation3], 4
      %s238 = int_to_ptr.vmem [resolvable:$true] %s237
      %240 = dma.vmem_to_hbm [thread:$0]  %s238, 128, %s5, [#allocation4]
    $region25: #{tpu_custom_call.1} parent=1 // pred_fallthru
      _
    // Predicated region
    $region26: #{tpu_custom_call.1} parent=1 // pred_check
      _
    $region27: #{tpu_custom_call.1} parent=1 // pred_check_branch
      %242 = sbr.rel (0) target = $region29
    $region28: #{tpu_custom_call.1} parent=1 // pred_region
      %243 = dma.done [#allocation4], 128
    $region29: #{tpu_custom_call.1} parent=1 // pred_fallthru
      _
    %244 = vsyncpa [#allocation4], 1

</llo_original>
